<compile_context>
chip_gen: v7x
topology: tpu7x:2x2x1
jax: 0.10.0
libtpu: 0.0.40
codegen_flags: <defaults>
</compile_context>

<pallas_src>
import functools

import jax
import jax.numpy as jnp
from jax.experimental import pallas as pl
from jax.experimental.pallas import tpu as pltpu


def _round_up(n, m):
    return ((n + m - 1) // m) * m


def encoder_kernel(x_ref, w1_ref, b1_ref, wh_ref, bh_ref, out_ref, *, latent_dim):
    # hidden = tanh(x @ W1 + b1)  -> one MXU pass (K = data_dim <= 128) + VPU/EUP tanh
    h = jnp.tanh(
        jnp.dot(x_ref[...], w1_ref[...], preferred_element_type=jnp.float32)
        + b1_ref[...]
    )
    # fused heads: z = h @ [Wmu || Wsig] + [bmu || bsig]   (single MXU pass)
    z = jnp.dot(h, wh_ref[...], preferred_element_type=jnp.float32) + bh_ref[...]
    # lanes [0, L)    -> mu (identity)
    # lanes [L, 2L)   -> sigma_square = exp(.)
    # lanes [2L, 128) -> zero padding, sliced off in the wrapper
    lane = jax.lax.broadcasted_iota(jnp.int32, z.shape, dimension=1)
    out_ref[...] = jnp.where(lane < latent_dim, z, jnp.exp(z)).astype(out_ref.dtype)


def prepare_encoder_params(w1, b1, wmu, bmu, wsig, bsig):
    """One-time weight padding / head fusion (hoisted out of the hot path).

    Returns lane-padded f32 weights:
      w1p: (D, Hp), b1p: (1, Hp), wh: (Hp, Op), bh: (1, Op)
    with Hp = round_up(H, 128), Op = max(round_up(2L, 128), 128).
    All padding is zeros so padded hidden lanes contribute nothing downstream.
    """
    D, H = w1.shape
    L = wmu.shape[1]
    Hp = _round_up(H, 128)
    Op = max(_round_up(2 * L, 128), 128)

    f32 = jnp.float32
    w1p = jnp.zeros((D, Hp), f32).at[:, :H].set(w1.astype(f32))
    b1p = jnp.zeros((1, Hp), f32).at[:, :H].set(jnp.reshape(b1, (1, -1)).astype(f32))
    wh = (
        jnp.zeros((Hp, Op), f32)
        .at[:H, :L].set(wmu.astype(f32))
        .at[:H, L:2 * L].set(wsig.astype(f32))
    )
    bh = (
        jnp.zeros((1, Op), f32)
        .at[:, :L].set(jnp.reshape(bmu, (1, -1)).astype(f32))
        .at[:, L:2 * L].set(jnp.reshape(bsig, (1, -1)).astype(f32))
    )
    # NOTE: folding b1 into w1p via an augmented ones-column on x would require
    # re-padding x every call — exactly the per-call work we just removed — so
    # the (cheap, one-vreg) b1 add stays in the kernel.
    return {"w1p": w1p, "b1p": b1p, "wh": wh, "bh": bh, "latent_dim": L}


@functools.partial(jax.jit, static_argnames=("latent_dim",))
def _encoder_call(x, w1p, b1p, wh, bh, *, latent_dim):
    B = x.shape[0]
    Op = wh.shape[1]
    # Tiny problem: single grid point, everything resident in VMEM (~140 KB).
    vmem_spec = pl.BlockSpec(memory_space=pltpu.MemorySpace.VMEM)
    out = pl.pallas_call(
        functools.partial(encoder_kernel, latent_dim=latent_dim),
        out_shape=jax.ShapeDtypeStruct((B, Op), jnp.float32),
        in_specs=[vmem_spec] * 5,
        out_specs=vmem_spec,
    )(x.astype(jnp.float32), w1p, b1p, wh, bh)
    mu = out[:, :latent_dim]
    sigma_square = out[:, latent_dim:2 * latent_dim]
    return mu, sigma_square


def encoder_forward(x, prepared):
    """VAE encoder forward: returns (mu, sigma_square), matching the PyTorch module."""
    return _encoder_call(
        x,
        prepared["w1p"],
        prepared["b1p"],
        prepared["wh"],
        prepared["bh"],
        latent_dim=prepared["latent_dim"],
    )


def init_params(key, data_dimension, hidden_units, latent_dimension):
    """Deterministic synthetic init (PyTorch nn.Linear-like uniform ranges)."""
    ks = jax.random.split(key, 6)

    def linear(kw, kb, fan_in, fan_out):
        bound = 1.0 / jnp.sqrt(fan_in)
        w = jax.random.uniform(kw, (fan_in, fan_out), jnp.float32, -bound, bound)
        b = jax.random.uniform(kb, (1, fan_out), jnp.float32, -bound, bound)
        return w, b

    w1, b1 = linear(ks[0], ks[1], data_dimension, hidden_units)
    wmu, bmu = linear(ks[2], ks[3], hidden_units, latent_dimension)
    wsig, bsig = linear(ks[4], ks[5], hidden_units, latent_dimension)
    return w1, b1, wmu, bmu, wsig, bsig


if __name__ == "__main__":
    # Small shapes consistent with the module's forward.
    batch = 8
    data_dimension = 64
    hidden_units = 32
    latent_dimension = 16

    key = jax.random.PRNGKey(0)
    kx, kp = jax.random.split(key)
    x = jax.random.normal(kx, (batch, data_dimension), jnp.float32)
    params = init_params(kp, data_dimension, hidden_units, latent_dimension)

    # One-time prep (outside the hot path), then a lightweight per-call forward.
    prepared = jax.tree_util.tree_map(
        lambda a: jax.block_until_ready(a) if isinstance(a, jax.Array) else a,
        prepare_encoder_params(*params),
    )
    mu, sigma_square = jax.block_until_ready(encoder_forward(x, prepared))

    # Pure-JAX reference check.
    w1, b1, wmu, bmu, wsig, bsig = params
    h_ref = jnp.tanh(x @ w1 + b1)
    mu_ref = h_ref @ wmu + bmu
    sig_ref = jnp.exp(h_ref @ wsig + bsig)
    assert mu.shape == (batch, latent_dimension)
    assert sigma_square.shape == (batch, latent_dimension)
    assert jnp.allclose(mu, mu_ref, atol=1e-5, rtol=1e-5)
    assert jnp.allclose(sigma_square, sig_ref, atol=1e-5, rtol=1e-5)

    print("KERNEL_OK")
</pallas_src>

<mosaic_0001>
module attributes {stable_mosaic.version = 11 : i64} {
  func.func @encoder_kernel(%arg0: memref<8x64xf32, #tpu.memory_space<vmem>>, %arg1: memref<64x128xf32, #tpu.memory_space<vmem>>, %arg2: memref<1x128xf32, #tpu.memory_space<vmem>>, %arg3: memref<128x128xf32, #tpu.memory_space<vmem>>, %arg4: memref<1x128xf32, #tpu.memory_space<vmem>>, %arg5: memref<8x128xf32, #tpu.memory_space<vmem>>) attributes {dimension_semantics = [], scalar_prefetch = 0 : i64, scratch_operands = 0 : i64, tpu.core_type = #tpu.core_type<tc>} {
    %c0 = arith.constant 0 : index
    %c0_0 = arith.constant 0 : index
    %0 = vector.load %arg0[%c0, %c0_0] : memref<8x64xf32, #tpu.memory_space<vmem>>, vector<8x64xf32>
    %c0_1 = arith.constant 0 : index
    %c0_2 = arith.constant 0 : index
    %1 = vector.load %arg1[%c0_1, %c0_2] : memref<64x128xf32, #tpu.memory_space<vmem>>, vector<64x128xf32>
    %cst = arith.constant dense<0.000000e+00> : vector<8x128xf32>
    %2 = tpu.matmul %0, %1, %cst {dimension_numbers = #tpu.dot_dimension_numbers<[1], [0], [0], [1], [0, 0, 1, 1], [], []>} : vector<8x64xf32>, vector<64x128xf32>, vector<8x128xf32> -> vector<8x128xf32>
    %c0_3 = arith.constant 0 : index
    %c0_4 = arith.constant 0 : index
    %3 = vector.load %arg2[%c0_3, %c0_4] : memref<1x128xf32, #tpu.memory_space<vmem>>, vector<1x128xf32>
    %4 = vector.broadcast %3 : vector<1x128xf32> to vector<8x128xf32>
    %5 = arith.addf %2, %4 : vector<8x128xf32>
    %6 = math.tanh %5 : vector<8x128xf32>
    %c0_5 = arith.constant 0 : index
    %c0_6 = arith.constant 0 : index
    %7 = vector.load %arg3[%c0_5, %c0_6] : memref<128x128xf32, #tpu.memory_space<vmem>>, vector<128x128xf32>
    %cst_7 = arith.constant dense<0.000000e+00> : vector<8x128xf32>
    %8 = tpu.matmul %6, %7, %cst_7 {dimension_numbers = #tpu.dot_dimension_numbers<[1], [0], [0], [1], [0, 0, 1, 1], [], []>} : vector<8x128xf32>, vector<128x128xf32>, vector<8x128xf32> -> vector<8x128xf32>
    %c0_8 = arith.constant 0 : index
    %c0_9 = arith.constant 0 : index
    %9 = vector.load %arg4[%c0_8, %c0_9] : memref<1x128xf32, #tpu.memory_space<vmem>>, vector<1x128xf32>
    %10 = vector.broadcast %9 : vector<1x128xf32> to vector<8x128xf32>
    %11 = arith.addf %8, %10 : vector<8x128xf32>
    %12 = tpu.iota {dimensions = array<i32: 1>} : vector<8x128xi32>
    %c16_i32 = arith.constant 16 : i32
    %13 = vector.broadcast %c16_i32 : i32 to vector<8x128xi32>
    %14 = arith.cmpi slt, %12, %13 : vector<8x128xi32>
    %15 = math.exp %11 : vector<8x128xf32>
    %16 = arith.select %14, %11, %15 : vector<8x128xi1>, vector<8x128xf32>
    %c0_10 = arith.constant 0 : index
    %c0_11 = arith.constant 0 : index
    %17 = vector.load %arg5[%c0_10, %c0_11] : memref<8x128xf32, #tpu.memory_space<vmem>>, vector<8x128xf32>
    tpu.vector_store %arg5[%c0_10, %c0_11], %16 {strides = array<i32>} : memref<8x128xf32, #tpu.memory_space<vmem>>, vector<8x128xf32>,
    return
  }
}

</mosaic_0001>

<llo_original>
// kernel: _encoder_call.1
$region0: #{_encoder_call.1}
  #allocation0 [shape = 'u32[]', space=smem, size = 0x4, offset = 0x4, fixed_abs, tag = 'smem constant byte address 0x4 - core index']
  #allocation1 [shape = 'u32[144,128]{1,0:T(1,128)}', space=vmem, size = 0x12000, scoped, tag = 'internal scratch']
  %s0 = inlined_call_operand.hbm [shape: f32[8,64], index: 0, kind: input, shape index: {}]
  %s1 = inlined_call_operand.hbm [shape: f32[64,128], index: 1, kind: input, shape index: {}]
  %s2 = inlined_call_operand.vmem [shape: f32[1,128], index: 2, kind: input, shape index: {}]
  %s3 = inlined_call_operand.hbm [shape: f32[128,128], index: 3, kind: input, shape index: {}]
  %s4 = inlined_call_operand.vmem [shape: f32[1,128], index: 4, kind: input, shape index: {}]
  %s5 = inlined_call_operand.vmem [shape: f32[8,128], index: 5, kind: output, shape index: {}]
  %s6 = sld [smem:[#allocation0]]
  $region42: #{_encoder_call.1} parent=0
    _
  %s8 = ssub.s32 1, %s6
  %s9 = scalar_select 0, %s8, %s6
  $region1: #{_encoder_call.1} parent=0
    #allocation2 [shape = 'u8[4096]{0}', space=vmem, size = 0x1000, scoped, tag = 'input window, operand 0, single buffered']
    #allocation3 [shape = 's32[1]{0}', space=sflag, size = 0x4, scoped, tag = 'scoped memory for _encoder_call.1']
    #allocation4 [shape = 'u8[32768]{0}', space=vmem, size = 0x8000, scoped, tag = 'input window, operand 1, single buffered']
    #allocation5 [shape = 's32[1]{0}', space=sflag, size = 0x4, scoped, tag = 'scoped memory for _encoder_call.1']
    #allocation6 [shape = 'u8[65536]{0}', space=vmem, size = 0x10000, scoped, tag = 'input window, operand 3, single buffered']
    %10 = vsyncpa [#allocation3], 0
    %11 = vsyncpa [#allocation5], 0
    // Predicated region
    $region2: #{_encoder_call.1} parent=1 // pred_check
      _
    $region3: #{_encoder_call.1} parent=1 // pred_check_branch
      %13 = sbr.rel (0) target = $region5
    $region4: #{_encoder_call.1} parent=1 // pred_region
      %s15 = ssub.s32 128, 128
      %16 = vsyncadd [#allocation3], %s15
      %s18 = sshll.u32 [#allocation2], 4
      %s19 = int_to_ptr.vmem [resolvable:$true] %s18
      %21 = dma.hbm_to_vmem [thread:$0]  %s0, 128, %s19, [#allocation3]
    $region5: #{_encoder_call.1} parent=1 // pred_fallthru
      _
    // Predicated region
    $region6: #{_encoder_call.1} parent=1 // pred_check
      _
    $region7: #{_encoder_call.1} parent=1 // pred_check_branch
      %23 = sbr.rel (0) target = $region9
    $region8: #{_encoder_call.1} parent=1 // pred_region
      %s25 = ssub.s32 1024, 1024
      %26 = vsyncadd [#allocation5], %s25
      %s27 = sshll.u32 [#allocation4], 4
      %s28 = int_to_ptr.vmem [resolvable:$true] %s27
      %33 = dma.hbm_to_vmem [thread:$0]  %s1, 1024, %s28, [#allocation5], 128, 128, 8
    $region9: #{_encoder_call.1} parent=1 // pred_fallthru
      _
    // Predicated region
    $region10: #{_encoder_call.1} parent=1 // pred_check
      _
    $region11: #{_encoder_call.1} parent=1 // pred_check_branch
      %35 = sbr.rel (0) target = $region13
    $region12: #{_encoder_call.1} parent=1 // pred_region
      _
    $region13: #{_encoder_call.1} parent=1 // pred_fallthru
      _
    // Predicated region
    $region14: #{_encoder_call.1} parent=1 // pred_check
      _
    $region15: #{_encoder_call.1} parent=1 // pred_check_branch
      %37 = sbr.rel (0) target = $region17
    $region16: #{_encoder_call.1} parent=1 // pred_region
      %s39 = ssub.s32 2048, 2048
      %40 = vsyncadd [#allocation5], %s39
      %s41 = sshll.u32 [#allocation6], 4
      %s42 = int_to_ptr.vmem [resolvable:$true] %s41
      %47 = dma.hbm_to_vmem [thread:$0]  %s3, 2048, %s42, [#allocation5], 128, 128, 8
    $region17: #{_encoder_call.1} parent=1 // pred_fallthru
      _
    // Predicated region
    $region18: #{_encoder_call.1} parent=1 // pred_check
      _
    $region19: #{_encoder_call.1} parent=1 // pred_check_branch
      %49 = sbr.rel (0) target = $region21
    $region20: #{_encoder_call.1} parent=1 // pred_region
      _
    $region21: #{_encoder_call.1} parent=1 // pred_fallthru
      _
    // Predicated region
    $region22: #{_encoder_call.1} parent=1 // pred_check
      _
    $region23: #{_encoder_call.1} parent=1 // pred_check_branch
      %51 = sbr.rel (0) target = $region25
    $region24: #{_encoder_call.1} parent=1 // pred_region
      %52 = dma.done [#allocation3], 128
    $region25: #{_encoder_call.1} parent=1 // pred_fallthru
      _
    // Predicated region
    $region26: #{_encoder_call.1} parent=1 // pred_check
      _
    $region27: #{_encoder_call.1} parent=1 // pred_check_branch
      %54 = sbr.rel (0) target = $region29
    $region28: #{_encoder_call.1} parent=1 // pred_region
      %55 = dma.done [#allocation5], 1024
    $region29: #{_encoder_call.1} parent=1 // pred_fallthru
      _
    // Predicated region
    $region30: #{_encoder_call.1} parent=1 // pred_check
      _
    $region31: #{_encoder_call.1} parent=1 // pred_check_branch
      %57 = sbr.rel (0) target = $region33
    $region32: #{_encoder_call.1} parent=1 // pred_region
      %58 = dma.done [#allocation5], 2048
    $region33: #{_encoder_call.1} parent=1 // pred_fallthru
      _
    %v59 = vld [vmem:[#allocation2] sm:$0xff]
    %v60 = vld [vmem:[#allocation4] sm:$0xff]
    %v61 = vld [vmem:[#allocation4 + $0x8] sm:$0xff]
    %v62 = vld [vmem:[#allocation4 + $0x10] sm:$0xff]
    %v63 = vld [vmem:[#allocation4 + $0x18] sm:$0xff]
    %v64 = vld [vmem:[#allocation4 + $0x20] sm:$0xff]
    %v65 = vld [vmem:[#allocation4 + $0x28] sm:$0xff]
    %v66 = vld [vmem:[#allocation4 + $0x30] sm:$0xff]
    %v67 = vld [vmem:[#allocation4 + $0x38] sm:$0xff]
    %v68 = vld [vmem:[%s2] sm:$0x1]
    %v70 = vlaneseq
    %v71 = vshrl.u32 %v70, 7
    %v72 = vsub.s32 0, %v71
    %v73 = vrot.slane %v68, %v72
    %vm75 = vcmask 523264
    %v77 = vsel %vm75, %v59, 0
    %79 = vmatprep.subr.mxu0 0.0
    %80 = vmatpush1.msra.mxu0 %v60
    %81 = vmatprep.subr.mxu0 0.0
    %82 = vmatpush1.msra.mxu0 %v61
    %83 = vmatprep.subr.mxu0 0.0
    %84 = vmatpush1.msra.mxu0 %v62
    %85 = vmatprep.subr.mxu0 0.0
    %86 = vmatpush1.msra.mxu0 %v63
    %87 = vmatprep.subr.mxu0 0.0
    %88 = vmatpush1.msra.mxu0 %v64
    %89 = vmatprep.subr.mxu0 0.0
    %90 = vmatpush1.msra.mxu0 %v65
    %91 = vmatprep.subr.mxu0 0.0
    %92 = vmatpush1.msra.mxu0 %v66
    %93 = vmatprep.subr.mxu0 0.0
    %94 = vmatpush1.msra.mxu0 %v67
    %95 = vmatprep.subr.mxu0 0.0
    %96 = vmatpush1.msra.mxu0 0.0
    %97 = vmatprep.subr.mxu0 0.0
    %98 = vmatpush1.msra.mxu0 0.0
    %99 = vmatprep.subr.mxu0 0.0
    %100 = vmatpush1.msra.mxu0 0.0
    %101 = vmatprep.subr.mxu0 0.0
    %102 = vmatpush1.msra.mxu0 0.0
    %103 = vmatprep.subr.mxu0 0.0
    %104 = vmatpush1.msra.mxu0 0.0
    %105 = vmatprep.subr.mxu0 0.0
    %106 = vmatpush1.msra.mxu0 0.0
    %107 = vmatprep.subr.mxu0 0.0
    %108 = vmatpush1.msra.mxu0 0.0
    %109 = vmatprep.subr.mxu0 0.0
    %110 = vmatpush1.msra.mxu0 0.0
    %111 = vmatprep.subr.mxu0 0.0
    %112 = vmatpush1.msra.mxu0 0.0
    %113 = vmatprep.subr.mxu0 0.0
    %114 = vmatpush1.msra.mxu0 0.0
    %115 = vmatprep.subr.mxu0 0.0
    %116 = vmatpush1.msra.mxu0 0.0
    %117 = vmatprep.subr.mxu0 0.0
    %118 = vmatpush1.msra.mxu0 0.0
    %119 = vmatprep.subr.mxu0 0.0
    %120 = vmatpush1.msra.mxu0 0.0
    %121 = vmatprep.subr.mxu0 0.0
    %122 = vmatpush1.msra.mxu0 0.0
    %123 = vmatprep.subr.mxu0 0.0
    %124 = vmatpush1.msra.mxu0 0.0
    %125 = vmatprep.subr.mxu0 0.0
    %126 = vmatpush1.msra.mxu0 0.0
    %127 = vmatprep.subr.mxu0 0.0
    %128 = vmatpush1.msra.mxu0 0.0
    %129 = vmatprep.subr.mxu0 0.0
    %130 = vmatpush1.msra.mxu0 0.0
    %131 = vmatprep.subr.mxu0 0.0
    %132 = vmatpush1.msra.mxu0 0.0
    %133 = vmatprep.subr.mxu0 0.0
    %134 = vmatpush1.msra.mxu0 0.0
    %135 = vmatprep.subr.mxu0 0.0
    %136 = vmatpush1.msra.mxu0 0.0
    %137 = vmatprep.subr.mxu0 0.0
    %138 = vmatpush1.msra.mxu0 0.0
    %139 = vmatprep.subr.mxu0 0.0
    %140 = vmatpush1.msra.mxu0 0.0
    %141 = vmatprep.subr.mxu0 0.0
    %142 = vmatpush1.msra.mxu0 0.0
    %143 = vmatprep.mubr.f32.mxu0 0.0
    %144 = vmatmul.mubr.f32.gmra.mrb[0].mxu0 %v77
    %v145 = vpop.f32.mrb[0].mxu0
    %v146 = vadd.f32 %v73, %v145
    %v147 = vpop.f32.mrb[0].mxu0
    %148 = vdwg.mxu0
    %v149 = vtanh.pop %v146
    %v150 = vld [vmem:[#allocation6] sm:$0xff]
    %v151 = vld [vmem:[#allocation6 + $0x8] sm:$0xff]
    %v152 = vld [vmem:[#allocation6 + $0x10] sm:$0xff]
    %v153 = vld [vmem:[#allocation6 + $0x18] sm:$0xff]
    %v154 = vld [vmem:[#allocation6 + $0x20] sm:$0xff]
    %v155 = vld [vmem:[#allocation6 + $0x28] sm:$0xff]
    %v156 = vld [vmem:[#allocation6 + $0x30] sm:$0xff]
    %v157 = vld [vmem:[#allocation6 + $0x38] sm:$0xff]
    %v158 = vld [vmem:[#allocation6 + $0x40] sm:$0xff]
    %v159 = vld [vmem:[#allocation6 + $0x48] sm:$0xff]
    %v160 = vld [vmem:[#allocation6 + $0x50] sm:$0xff]
    %v161 = vld [vmem:[#allocation6 + $0x58] sm:$0xff]
    %v162 = vld [vmem:[#allocation6 + $0x60] sm:$0xff]
    %v163 = vld [vmem:[#allocation6 + $0x68] sm:$0xff]
    %v164 = vld [vmem:[#allocation6 + $0x70] sm:$0xff]
    %v165 = vld [vmem:[#allocation6 + $0x78] sm:$0xff]
    %v166 = vld [vmem:[%s4] sm:$0x1]
    %v168 = vlaneseq
    %v169 = vshrl.u32 %v168, 7
    %v170 = vsub.s32 0, %v169
    %v171 = vrot.slane %v166, %v170
    %173 = vmatprep.subr.mxu0 0.0
    %174 = vmatpush1.msra.mxu0 %v150
    %175 = vmatprep.subr.mxu0 0.0
    %176 = vmatpush1.msra.mxu0 %v151
    %177 = vmatprep.subr.mxu0 0.0
    %178 = vmatpush1.msra.mxu0 %v152
    %179 = vmatprep.subr.mxu0 0.0
    %180 = vmatpush1.msra.mxu0 %v153
    %181 = vmatprep.subr.mxu0 0.0
    %182 = vmatpush1.msra.mxu0 %v154
    %183 = vmatprep.subr.mxu0 0.0
    %184 = vmatpush1.msra.mxu0 %v155
    %185 = vmatprep.subr.mxu0 0.0
    %186 = vmatpush1.msra.mxu0 %v156
    %187 = vmatprep.subr.mxu0 0.0
    %188 = vmatpush1.msra.mxu0 %v157
    %189 = vmatprep.subr.mxu0 0.0
    %190 = vmatpush1.msra.mxu0 %v158
    %191 = vmatprep.subr.mxu0 0.0
    %192 = vmatpush1.msra.mxu0 %v159
    %193 = vmatprep.subr.mxu0 0.0
    %194 = vmatpush1.msra.mxu0 %v160
    %195 = vmatprep.subr.mxu0 0.0
    %196 = vmatpush1.msra.mxu0 %v161
    %197 = vmatprep.subr.mxu0 0.0
    %198 = vmatpush1.msra.mxu0 %v162
    %199 = vmatprep.subr.mxu0 0.0
    %200 = vmatpush1.msra.mxu0 %v163
    %201 = vmatprep.subr.mxu0 0.0
    %202 = vmatpush1.msra.mxu0 %v164
    %203 = vmatprep.subr.mxu0 0.0
    %204 = vmatpush1.msra.mxu0 %v165
    %205 = vmatprep.subr.mxu0 0.0
    %206 = vmatpush1.msra.mxu0 0.0
    %207 = vmatprep.subr.mxu0 0.0
    %208 = vmatpush1.msra.mxu0 0.0
    %209 = vmatprep.subr.mxu0 0.0
    %210 = vmatpush1.msra.mxu0 0.0
    %211 = vmatprep.subr.mxu0 0.0
    %212 = vmatpush1.msra.mxu0 0.0
    %213 = vmatprep.subr.mxu0 0.0
    %214 = vmatpush1.msra.mxu0 0.0
    %215 = vmatprep.subr.mxu0 0.0
    %216 = vmatpush1.msra.mxu0 0.0
    %217 = vmatprep.subr.mxu0 0.0
    %218 = vmatpush1.msra.mxu0 0.0
    %219 = vmatprep.subr.mxu0 0.0
    %220 = vmatpush1.msra.mxu0 0.0
    %221 = vmatprep.subr.mxu0 0.0
    %222 = vmatpush1.msra.mxu0 0.0
    %223 = vmatprep.subr.mxu0 0.0
    %224 = vmatpush1.msra.mxu0 0.0
    %225 = vmatprep.subr.mxu0 0.0
    %226 = vmatpush1.msra.mxu0 0.0
    %227 = vmatprep.subr.mxu0 0.0
    %228 = vmatpush1.msra.mxu0 0.0
    %229 = vmatprep.subr.mxu0 0.0
    %230 = vmatpush1.msra.mxu0 0.0
    %231 = vmatprep.subr.mxu0 0.0
    %232 = vmatpush1.msra.mxu0 0.0
    %233 = vmatprep.subr.mxu0 0.0
    %234 = vmatpush1.msra.mxu0 0.0
    %235 = vmatprep.subr.mxu0 0.0
    %236 = vmatpush1.msra.mxu0 0.0
    %237 = vmatprep.mubr.f32.mxu0 0.0
    %238 = vmatmul.mubr.f32.gmra.mrb[0].mxu0 %v149
    %v239 = vpop.f32.mrb[0].mxu0
    %v240 = vadd.f32 %v171, %v239
    %v241 = vpop.f32.mrb[0].mxu0
    %242 = vdwg.mxu0
    %v243 = vlaneseq
    %v244 = vand.u32 %v243, 127
    %vm245 = vcmp.lt.s32.totalorder %v244, 16
    %v246 = vmul.f32 %v240, 1.442695
    %v247 = vpow.pop %v246
    %v248 = vsel %vm245, %v240, %v247
    %249 = vst [vmem:[%s5] sm:$0xff] %v248
    // Predicated region
    $region34: #{_encoder_call.1} parent=1 // pred_check
      _
    $region35: #{_encoder_call.1} parent=1 // pred_check_branch
      %251 = sbr.rel (0) target = $region37
    $region36: #{_encoder_call.1} parent=1 // pred_region
      _
    $region37: #{_encoder_call.1} parent=1 // pred_fallthru
      _
    // Predicated region
    $region38: #{_encoder_call.1} parent=1 // pred_check
      _
    $region39: #{_encoder_call.1} parent=1 // pred_check_branch
      %253 = sbr.rel (0) target = $region41
    $region40: #{_encoder_call.1} parent=1 // pred_region
      _
    $region41: #{_encoder_call.1} parent=1 // pred_fallthru
      _
    %254 = vsyncpa [#allocation3], 1
    %255 = vsyncpa [#allocation5], 1

</llo_original>
